<compile_context>
chip_gen: v7x
topology: tpu7x:2x2x1
jax: 0.10.0
libtpu: 0.0.40
codegen_flags: <defaults>
</compile_context>

<pallas_src>
import jax
import jax.numpy as jnp
from jax.experimental import pallas as pl
from jax.experimental.pallas import tpu as pltpu

TEMPERATURE = 5.0
LN_EPS = 1e-5

# Row indices inside the packed small-parameter buffer (shape (10, hidden)).
_ROW_B1, _ROW_G1, _ROW_BE1 = 0, 1, 2
_ROW_B2, _ROW_G2, _ROW_BE2 = 3, 4, 5
_ROW_BG, _ROW_WDL, _ROW_WDG, _ROW_BD = 6, 7, 8, 9
_NUM_PACKED_ROWS = 10


def _layernorm(h, gamma, beta):
    """PyTorch-style LayerNorm: two-pass, biased variance (H <= 256, cheap)."""
    mu = jnp.mean(h, axis=-1, keepdims=True)
    xc = h - mu
    var = jnp.mean(xc * xc, axis=-1, keepdims=True)
    return xc * jax.lax.rsqrt(var + LN_EPS) * gamma + beta


def alfa_kernel(act_ref, wbig_ref, pk_ref, out_ref):
    tile_b, fused_in = act_ref.shape              # fused_in = 4*half = 2*input_dim
    H = wbig_ref.shape[0] - fused_in              # wbig rows = fused_in + H
    H2, H4 = H // 2, H // 4

    # Small params: direct (1, n) slab reads from the packed ref.
    b1 = pk_ref[_ROW_B1:_ROW_B1 + 1, :H]
    g1 = pk_ref[_ROW_G1:_ROW_G1 + 1, :H]
    be1 = pk_ref[_ROW_BE1:_ROW_BE1 + 1, :H]
    b2 = pk_ref[_ROW_B2:_ROW_B2 + 1, :H2]
    g2 = pk_ref[_ROW_G2:_ROW_G2 + 1, :H2]
    be2 = pk_ref[_ROW_BE2:_ROW_BE2 + 1, :H2]
    bg = pk_ref[_ROW_BG:_ROW_BG + 1, :H4]
    wdl = pk_ref[_ROW_WDL:_ROW_WDL + 1, :H2]      # pre-scaled by 1/temperature
    wdg = pk_ref[_ROW_WDG:_ROW_WDG + 1, :H4]      # pre-scaled by 1/temperature
    bd = pk_ref[_ROW_BD:_ROW_BD + 1, 0:1]         # pre-scaled by 1/temperature

    act = act_ref[...]                                        # (tile_b, fused_in)
    wblk = wbig_ref[0:fused_in, 0:H + H4]                     # [[W1, 0], [0, Wg]]
    w2 = wbig_ref[fused_in:fused_in + H, 0:H2]

    # Stage 1: ONE MXU dot covers both Linear(input->H) and Linear(input->H/4).
    s1 = jnp.dot(act, wblk, preferred_element_type=jnp.float32)   # (tile_b, H+H4)
    h1 = jnp.maximum(_layernorm(s1[:, :H] + b1, g1, be1), 0.0)
    # TODO(synk): Dropout(0.1) is identity in eval mode; training-mode RNG mask not implemented.
    gf = jnp.maximum(s1[:, H:H + H4] + bg, 0.0)                    # global features

    # Stage 2: Linear(H -> H/2) -> LayerNorm -> ReLU.
    h2 = jnp.dot(h1, w2, preferred_element_type=jnp.float32) + b2
    local = jnp.maximum(_layernorm(h2, g2, be2), 0.0)

    # Decision layer (split over the local/global concat): transposed
    # contractions emit lane-major (1, tile_b) logits directly.
    dn = (((1,), (1,)), ((), ()))
    logits = (jax.lax.dot_general(wdl, local, dn, preferred_element_type=jnp.float32)
              + jax.lax.dot_general(wdg, gf, dn, preferred_element_type=jnp.float32)
              + bd)                                                # (1, tile_b)

    out_ref[0, :, :] = jax.nn.sigmoid(logits)


def _pick_tile_b(B):
    """Large tiles (amortize per-step overhead on v5e/v6e) but keep >= 2 grid
    steps for large B so the 'parallel' batch axis occupies both TCs on v7x."""
    if B <= 256:
        return B                      # single full-array tile
    for t in (1024, 512, 256, 128):
        if B >= 2 * t:
            return t
    return 128


def alfa_policy_forward_fused(act_fused, params):
    """act_fused: (B, 4*half) = [x | y | x_global | y_global], lane-packed."""
    B, fused_in = act_fused.shape
    tile_b = _pick_tile_b(B)
    num_tiles = pl.cdiv(B, tile_b)

    wbig = params["wbig"]
    packed = params["packed"]

    out3 = pl.pallas_call(
        alfa_kernel,
        out_shape=jax.ShapeDtypeStruct((num_tiles, 1, tile_b), jnp.float32),
        grid=(num_tiles,),
        in_specs=[
            pl.BlockSpec((tile_b, fused_in), lambda i: (i, 0)),   # fused activations
            pl.BlockSpec(wbig.shape, lambda i: (0, 0)),           # all big weights (1 DMA)
            pl.BlockSpec(packed.shape, lambda i: (0, 0)),         # all small params (1 DMA)
        ],
        out_specs=pl.BlockSpec((1, 1, tile_b), lambda i: (i, 0, 0)),
        compiler_params=pltpu.CompilerParams(
            dimension_semantics=("parallel",)),
    )(act_fused, wbig, packed)

    # Lane-dense (num_tiles, 1, tile_b) slab -> (B, 1).
    # (If B % tile_b != 0 the padded tail rows are garbage but row-isolated and
    #  dropped by the slice below.)
    return out3.reshape(num_tiles * tile_b)[:B].reshape(B, 1)


def alfa_policy_forward(x, y, x_global, y_global, params):
    # Ideally the fused layout is produced upstream; this is a one-time XLA
    # concat over small feature dims feeding the single-DMA kernel input.
    act = jnp.concatenate([x, y, x_global, y_global], axis=1)
    return alfa_policy_forward_fused(act, params)


def pack_small_params(p, hidden_dim, temperature=TEMPERATURE):
    """Biases / LN params / decision weights -> one (10, hidden) buffer.
    1/temperature is folded into the decision weights and bias."""
    inv_t = 1.0 / float(temperature)

    def row(v, scale=1.0):
        v = jnp.asarray(v, jnp.float32).reshape(-1) * scale
        return jnp.pad(v, (0, hidden_dim - v.shape[0]))

    rows = [row(p["b1"]), row(p["g1"]), row(p["be1"]),
            row(p["b2"]), row(p["g2"]), row(p["be2"]),
            row(p["bg"]),
            row(p["wdl"], inv_t), row(p["wdg"], inv_t), row(p["bd"], inv_t)]
    return jnp.stack(rows)


def make_params(key, half_dim, hidden_dim):
    h, h2, h4 = hidden_dim, hidden_dim // 2, hidden_dim // 4
    input_dim = 2 * half_dim          # cat(x, y) width
    fused_in = 2 * input_dim          # cat(x, y, x_g, y_g) width
    ks = jax.random.split(key, 4)

    def lin(k, fan_in, fan_out):
        bound = 1.0 / (fan_in ** 0.5)
        kw, kb = jax.random.split(k)
        w = jax.random.uniform(kw, (fan_in, fan_out), jnp.float32, -bound, bound)
        b = jax.random.uniform(kb, (fan_out,), jnp.float32, -bound, bound)
        return w, b

    w1, b1 = lin(ks[0], input_dim, h)
    w2, b2 = lin(ks[1], h, h2)
    wg, bg = lin(ks[2], input_dim, h4)
    wd, bd = lin(ks[3], h2 + h4, 1)

    p = {
        "w1": w1, "b1": b1,
        "g1": jnp.ones((h,), jnp.float32), "be1": jnp.zeros((h,), jnp.float32),
        "w2": w2, "b2": b2,
        "g2": jnp.ones((h2,), jnp.float32), "be2": jnp.zeros((h2,), jnp.float32),
        "wg": wg, "bg": bg,
        "wd": wd, "bd": bd,
        "wdl": wd[:h2, 0], "wdg": wd[h2:, 0],
    }

    # One big weight buffer: block-diag [[W1, 0], [0, Wg]] on top, W2 below.
    cols = max(h + h4, h2)
    wbig = jnp.zeros((fused_in + h, cols), jnp.float32)
    wbig = wbig.at[:input_dim, :h].set(w1)
    wbig = wbig.at[input_dim:fused_in, h:h + h4].set(wg)
    wbig = wbig.at[fused_in:, :h2].set(w2)
    p["wbig"] = wbig

    p["packed"] = pack_small_params(p, h)
    return p


def reference_forward(x, y, x_global, y_global, p):
    """Pure-JAX reference with PyTorch semantics (eval mode)."""
    comb = jnp.concatenate([x, y], axis=1)
    gcomb = jnp.concatenate([x_global, y_global], axis=1)

    def ln(h, g, b):
        mu = jnp.mean(h, -1, keepdims=True)
        var = jnp.mean((h - mu) ** 2, -1, keepdims=True)
        return (h - mu) / jnp.sqrt(var + LN_EPS) * g + b

    h1 = jnp.maximum(ln(comb @ p["w1"] + p["b1"], p["g1"], p["be1"]), 0.0)
    local = jnp.maximum(ln(h1 @ p["w2"] + p["b2"], p["g2"], p["be2"]), 0.0)
    gfeat = jnp.maximum(gcomb @ p["wg"] + p["bg"], 0.0)
    logits = jnp.concatenate([local, gfeat], axis=1) @ p["wd"] + p["bd"]
    return jax.nn.sigmoid(logits / TEMPERATURE)


if __name__ == "__main__":
    half_dim = 16            # x and y each contribute 16 features -> input_dim = 32
    hidden_dim = 32

    key = jax.random.PRNGKey(0)
    kp, kdata = jax.random.split(key)
    params = make_params(kp, half_dim, hidden_dim)

    ok = True
    for B in (8, 1024):      # tiny demo shape + a tiled / megacore-parallel shape
        kx, ky, kxg, kyg, kdata = jax.random.split(kdata, 5)
        x = jax.random.normal(kx, (B, half_dim), jnp.float32)
        y = jax.random.normal(ky, (B, half_dim), jnp.float32)
        x_global = jax.random.normal(kxg, (B, half_dim), jnp.float32)
        y_global = jax.random.normal(kyg, (B, half_dim), jnp.float32)

        out = alfa_policy_forward(x, y, x_global, y_global, params)
        out = jax.block_until_ready(out)

        ref = reference_forward(x, y, x_global, y_global, params)
        assert out.shape == (B, 1)
        ok = ok and bool(jnp.allclose(out, ref, atol=1e-5, rtol=1e-5))

    assert ok, "mismatch vs reference"
    print("KERNEL_OK")
</pallas_src>

<mosaic_0001>
module attributes {stable_mosaic.version = 11 : i64} {
  func.func @alfa_kernel(%arg0: i32, %arg1: memref<8x64xf32, #tpu.memory_space<vmem>>, %arg2: memref<96x40xf32, #tpu.memory_space<vmem>>, %arg3: memref<10x32xf32, #tpu.memory_space<vmem>>, %arg4: memref<1x1x8xf32, #tpu.memory_space<vmem>>) attributes {dimension_semantics = [#tpu.dimension_semantics<parallel>], iteration_bounds = array<i64: 1>, scalar_prefetch = 0 : i64, scratch_operands = 0 : i64, tpu.core_type = #tpu.core_type<tc>, window_params = [{transform_indices = @transform_0, window_bounds = array<i64: 8, 64>}, {pipeline_mode = #tpu.pipeline_mode<synchronous>, transform_indices = @transform_1, window_bounds = array<i64: 96, 40>}, {pipeline_mode = #tpu.pipeline_mode<synchronous>, transform_indices = @transform_2, window_bounds = array<i64: 10, 32>}, {transform_indices = @transform_3, window_bounds = array<i64: 1, 1, 8>}]} {
    %c0 = arith.constant 0 : index
    %c0_0 = arith.constant 0 : index
    %0 = vector.load %arg3[%c0, %c0_0] : memref<10x32xf32, #tpu.memory_space<vmem>>, vector<1x32xf32>
    %c1 = arith.constant 1 : index
    %c0_1 = arith.constant 0 : index
    %1 = vector.load %arg3[%c1, %c0_1] : memref<10x32xf32, #tpu.memory_space<vmem>>, vector<1x32xf32>
    %c2 = arith.constant 2 : index
    %c0_2 = arith.constant 0 : index
    %2 = vector.load %arg3[%c2, %c0_2] : memref<10x32xf32, #tpu.memory_space<vmem>>, vector<1x32xf32>
    %c3 = arith.constant 3 : index
    %c0_3 = arith.constant 0 : index
    %3 = vector.load %arg3[%c3, %c0_3] : memref<10x32xf32, #tpu.memory_space<vmem>>, vector<1x16xf32>
    %c4 = arith.constant 4 : index
    %c0_4 = arith.constant 0 : index
    %4 = vector.load %arg3[%c4, %c0_4] : memref<10x32xf32, #tpu.memory_space<vmem>>, vector<1x16xf32>
    %c5 = arith.constant 5 : index
    %c0_5 = arith.constant 0 : index
    %5 = vector.load %arg3[%c5, %c0_5] : memref<10x32xf32, #tpu.memory_space<vmem>>, vector<1x16xf32>
    %c6 = arith.constant 6 : index
    %c0_6 = arith.constant 0 : index
    %6 = vector.load %arg3[%c6, %c0_6] : memref<10x32xf32, #tpu.memory_space<vmem>>, vector<1x8xf32>
    %c7 = arith.constant 7 : index
    %c0_7 = arith.constant 0 : index
    %7 = vector.load %arg3[%c7, %c0_7] : memref<10x32xf32, #tpu.memory_space<vmem>>, vector<1x16xf32>
    %c8 = arith.constant 8 : index
    %c0_8 = arith.constant 0 : index
    %8 = vector.load %arg3[%c8, %c0_8] : memref<10x32xf32, #tpu.memory_space<vmem>>, vector<1x8xf32>
    %c9 = arith.constant 9 : index
    %c0_9 = arith.constant 0 : index
    %9 = vector.load %arg3[%c9, %c0_9] : memref<10x32xf32, #tpu.memory_space<vmem>>, vector<1x1xf32>
    %c0_10 = arith.constant 0 : index
    %c0_11 = arith.constant 0 : index
    %10 = vector.load %arg1[%c0_10, %c0_11] : memref<8x64xf32, #tpu.memory_space<vmem>>, vector<8x64xf32>
    %c0_12 = arith.constant 0 : index
    %c0_13 = arith.constant 0 : index
    %11 = vector.load %arg2[%c0_12, %c0_13] : memref<96x40xf32, #tpu.memory_space<vmem>>, vector<64x40xf32>
    %c64 = arith.constant 64 : index
    %c0_14 = arith.constant 0 : index
    %12 = vector.load %arg2[%c64, %c0_14] : memref<96x40xf32, #tpu.memory_space<vmem>>, vector<32x16xf32>
    %cst = arith.constant dense<0.000000e+00> : vector<8x40xf32>
    %13 = tpu.matmul %10, %11, %cst {dimension_numbers = #tpu.dot_dimension_numbers<[1], [0], [0], [1], [0, 0, 1, 1], [], []>} : vector<8x64xf32>, vector<64x40xf32>, vector<8x40xf32> -> vector<8x40xf32>
    %14 = vector.extract_strided_slice %13 {offsets = [0, 0], sizes = [8, 32], strides = [1, 1]} : vector<8x40xf32> to vector<8x32xf32>
    %15 = vector.broadcast %0 : vector<1x32xf32> to vector<8x32xf32>
    %16 = arith.addf %14, %15 : vector<8x32xf32>
    %cst_15 = arith.constant dense<0.000000e+00> : vector<8xf32>
    %17 = vector.multi_reduction <add>, %16, %cst_15 [1] : vector<8x32xf32> to vector<8xf32>
    %18 = vector.shape_cast %17 : vector<8xf32> to vector<8x1xf32>
    %cst_16 = arith.constant 3.200000e+01 : f32
    %19 = vector.broadcast %cst_16 : f32 to vector<8x1xf32>
    %20 = arith.divf %18, %19 : vector<8x1xf32>
    %21 = vector.broadcast %20 : vector<8x1xf32> to vector<8x32xf32>
    %22 = arith.subf %16, %21 : vector<8x32xf32>
    %23 = arith.mulf %22, %22 : vector<8x32xf32>
    %cst_17 = arith.constant dense<0.000000e+00> : vector<8xf32>
    %24 = vector.multi_reduction <add>, %23, %cst_17 [1] : vector<8x32xf32> to vector<8xf32>
    %25 = vector.shape_cast %24 : vector<8xf32> to vector<8x1xf32>
    %cst_18 = arith.constant 3.200000e+01 : f32
    %26 = vector.broadcast %cst_18 : f32 to vector<8x1xf32>
    %27 = arith.divf %25, %26 : vector<8x1xf32>
    %cst_19 = arith.constant 9.99999974E-6 : f32
    %28 = vector.broadcast %cst_19 : f32 to vector<8x1xf32>
    %29 = arith.addf %27, %28 : vector<8x1xf32>
    %30 = math.rsqrt %29 : vector<8x1xf32>
    %31 = vector.broadcast %30 : vector<8x1xf32> to vector<8x32xf32>
    %32 = arith.mulf %22, %31 : vector<8x32xf32>
    %33 = vector.broadcast %1 : vector<1x32xf32> to vector<8x32xf32>
    %34 = arith.mulf %32, %33 : vector<8x32xf32>
    %35 = vector.broadcast %2 : vector<1x32xf32> to vector<8x32xf32>
    %36 = arith.addf %34, %35 : vector<8x32xf32>
    %cst_20 = arith.constant 0.000000e+00 : f32
    %37 = vector.broadcast %cst_20 : f32 to vector<8x32xf32>
    %38 = arith.maximumf %36, %37 : vector<8x32xf32>
    %39 = vector.extract_strided_slice %13 {offsets = [0, 32], sizes = [8, 8], strides = [1, 1]} : vector<8x40xf32> to vector<8x8xf32>
    %40 = vector.broadcast %6 : vector<1x8xf32> to vector<8x8xf32>
    %41 = arith.addf %39, %40 : vector<8x8xf32>
    %cst_21 = arith.constant 0.000000e+00 : f32
    %42 = vector.broadcast %cst_21 : f32 to vector<8x8xf32>
    %43 = arith.maximumf %41, %42 : vector<8x8xf32>
    %cst_22 = arith.constant dense<0.000000e+00> : vector<8x16xf32>
    %44 = tpu.matmul %38, %12, %cst_22 {dimension_numbers = #tpu.dot_dimension_numbers<[1], [0], [0], [1], [0, 0, 1, 1], [], []>} : vector<8x32xf32>, vector<32x16xf32>, vector<8x16xf32> -> vector<8x16xf32>
    %45 = vector.broadcast %3 : vector<1x16xf32> to vector<8x16xf32>
    %46 = arith.addf %44, %45 : vector<8x16xf32>
    %cst_23 = arith.constant dense<0.000000e+00> : vector<8xf32>
    %47 = vector.multi_reduction <add>, %46, %cst_23 [1] : vector<8x16xf32> to vector<8xf32>
    %48 = vector.shape_cast %47 : vector<8xf32> to vector<8x1xf32>
    %cst_24 = arith.constant 1.600000e+01 : f32
    %49 = vector.broadcast %cst_24 : f32 to vector<8x1xf32>
    %50 = arith.divf %48, %49 : vector<8x1xf32>
    %51 = vector.broadcast %50 : vector<8x1xf32> to vector<8x16xf32>
    %52 = arith.subf %46, %51 : vector<8x16xf32>
    %53 = arith.mulf %52, %52 : vector<8x16xf32>
    %cst_25 = arith.constant dense<0.000000e+00> : vector<8xf32>
    %54 = vector.multi_reduction <add>, %53, %cst_25 [1] : vector<8x16xf32> to vector<8xf32>
    %55 = vector.shape_cast %54 : vector<8xf32> to vector<8x1xf32>
    %cst_26 = arith.constant 1.600000e+01 : f32
    %56 = vector.broadcast %cst_26 : f32 to vector<8x1xf32>
    %57 = arith.divf %55, %56 : vector<8x1xf32>
    %cst_27 = arith.constant 9.99999974E-6 : f32
    %58 = vector.broadcast %cst_27 : f32 to vector<8x1xf32>
    %59 = arith.addf %57, %58 : vector<8x1xf32>
    %60 = math.rsqrt %59 : vector<8x1xf32>
    %61 = vector.broadcast %60 : vector<8x1xf32> to vector<8x16xf32>
    %62 = arith.mulf %52, %61 : vector<8x16xf32>
    %63 = vector.broadcast %4 : vector<1x16xf32> to vector<8x16xf32>
    %64 = arith.mulf %62, %63 : vector<8x16xf32>
    %65 = vector.broadcast %5 : vector<1x16xf32> to vector<8x16xf32>
    %66 = arith.addf %64, %65 : vector<8x16xf32>
    %cst_28 = arith.constant 0.000000e+00 : f32
    %67 = vector.broadcast %cst_28 : f32 to vector<8x16xf32>
    %68 = arith.maximumf %66, %67 : vector<8x16xf32>
    %cst_29 = arith.constant dense<0.000000e+00> : vector<1x8xf32>
    %69 = tpu.matmul %7, %68, %cst_29 {dimension_numbers = #tpu.dot_dimension_numbers<[1], [1], [0], [0], [0, 0, 1, 0], [], []>} : vector<1x16xf32>, vector<8x16xf32>, vector<1x8xf32> -> vector<1x8xf32>
    %cst_30 = arith.constant dense<0.000000e+00> : vector<1x8xf32>
    %70 = tpu.matmul %8, %43, %cst_30 {dimension_numbers = #tpu.dot_dimension_numbers<[1], [1], [0], [0], [0, 0, 1, 0], [], []>} : vector<1x8xf32>, vector<8x8xf32>, vector<1x8xf32> -> vector<1x8xf32>
    %71 = arith.addf %69, %70 : vector<1x8xf32>
    %72 = vector.broadcast %9 : vector<1x1xf32> to vector<1x8xf32>
    %73 = arith.addf %71, %72 : vector<1x8xf32>
    %74 = arith.negf %73 : vector<1x8xf32>
    %75 = math.exp %74 : vector<1x8xf32>
    %cst_31 = arith.constant 1.000000e+00 : f32
    %76 = vector.broadcast %cst_31 : f32 to vector<1x8xf32>
    %77 = arith.addf %76, %75 : vector<1x8xf32>
    %78 = arith.divf %76, %77 : vector<1x8xf32>
    %c0_32 = arith.constant 0 : index
    %c0_33 = arith.constant 0 : index
    %c0_34 = arith.constant 0 : index
    %79 = vector.load %arg4[%c0_32, %c0_33, %c0_34] : memref<1x1x8xf32, #tpu.memory_space<vmem>>, vector<1x1x8xf32>
    %80 = vector.shape_cast %79 : vector<1x1x8xf32> to vector<1x8xf32>
    %81 = vector.shape_cast %78 : vector<1x8xf32> to vector<1x1x8xf32>
    tpu.vector_store %arg4[%c0_32, %c0_33, %c0_34], %81 {strides = array<i32>} : memref<1x1x8xf32, #tpu.memory_space<vmem>>, vector<1x1x8xf32>,
    return
  }
  func.func @transform_0(%arg0: i32) -> (i32, i32) {
    %c0_i32 = arith.constant 0 : i32
    %c0_i32_0 = arith.constant 0 : i32
    return %arg0, %c0_i32 : i32, i32
  }
  func.func @transform_1(%arg0: i32) -> (i32, i32) {
    %c0_i32 = arith.constant 0 : i32
    %c0_i32_0 = arith.constant 0 : i32
    %c0_i32_1 = arith.constant 0 : i32
    return %c0_i32, %c0_i32_0 : i32, i32
  }
  func.func @transform_2(%arg0: i32) -> (i32, i32) {
    %c0_i32 = arith.constant 0 : i32
    %c0_i32_0 = arith.constant 0 : i32
    %c0_i32_1 = arith.constant 0 : i32
    return %c0_i32, %c0_i32_0 : i32, i32
  }
  func.func @transform_3(%arg0: i32) -> (i32, i32, i32) {
    %c0_i32 = arith.constant 0 : i32
    %c0_i32_0 = arith.constant 0 : i32
    %c0_i32_1 = arith.constant 0 : i32
    return %arg0, %c0_i32, %c0_i32_0 : i32, i32, i32
  }
}

</mosaic_0001>

<llo_original>
// kernel: tpu_custom_call.1
$region0: #{tpu_custom_call.1}
  #allocation0 [shape = 'u32[]', space=smem, size = 0x4, offset = 0x4, fixed_abs, tag = 'smem constant byte address 0x4 - core index']
  #allocation1 [shape = 'u32[144,128]{1,0:T(1,128)}', space=vmem, size = 0x12000, scoped, tag = 'internal scratch']
  %s0 = inlined_call_operand.vmem [shape: f32[8,64], index: 0, kind: input, shape index: {}]
  %s1 = inlined_call_operand.vmem [shape: f32[96,40], index: 1, kind: input, shape index: {}]
  %s2 = inlined_call_operand.vmem [shape: f32[10,32], index: 2, kind: input, shape index: {}]
  %s3 = inlined_call_operand.hbm [shape: f32[1,1,8], index: 3, kind: output, shape index: {}]
  %s4 = sld [smem:[#allocation0]]
  $region22: #{tpu_custom_call.1} parent=0
    _
  %s6 = ssub.s32 1, %s4
  %s7 = scalar_select 0, %s6, %s4
  $region1: #{tpu_custom_call.1} parent=0
    #allocation2 [shape = 'u8[512]{0}', space=vmem, size = 0x400, scoped, tag = 'output window, operand 0, single buffered']
    #allocation3 [shape = 's32[1]{0}', space=sflag, size = 0x4, scoped, tag = 'scoped memory for tpu_custom_call.1']
    %8 = vsyncpa [#allocation3], 0
    // Predicated region
    $region2: #{tpu_custom_call.1} parent=1 // pred_check
      _
    $region3: #{tpu_custom_call.1} parent=1 // pred_check_branch
      %10 = sbr.rel (0) target = $region5
    $region4: #{tpu_custom_call.1} parent=1 // pred_region
      _
    $region5: #{tpu_custom_call.1} parent=1 // pred_fallthru
      _
    // Predicated region
    $region6: #{tpu_custom_call.1} parent=1 // pred_check
      _
    $region7: #{tpu_custom_call.1} parent=1 // pred_check_branch
      %12 = sbr.rel (0) target = $region9
    $region8: #{tpu_custom_call.1} parent=1 // pred_region
      _
    $region9: #{tpu_custom_call.1} parent=1 // pred_fallthru
      _
    // Predicated region
    $region10: #{tpu_custom_call.1} parent=1 // pred_check
      _
    $region11: #{tpu_custom_call.1} parent=1 // pred_check_branch
      %14 = sbr.rel (0) target = $region13
    $region12: #{tpu_custom_call.1} parent=1 // pred_region
      _
    $region13: #{tpu_custom_call.1} parent=1 // pred_fallthru
      _
    %v15 = vld [vmem:[%s2] sm:$0x1]
    %v16 = vld [vmem:[%s2 + $0x1] sm:$0x1]
    %v17 = vld [vmem:[%s2 + $0x2] sm:$0x1]
    %v18 = vld [vmem:[%s2 + $0x3] sm:$0x1]
    %v19 = vld [vmem:[%s2 + $0x4] sm:$0x1]
    %v20 = vld [vmem:[%s2 + $0x5] sm:$0x1]
    %v21 = vld [vmem:[%s2 + $0x6] sm:$0x1]
    %v22 = vld [vmem:[%s2 + $0x7] sm:$0x1]
    %v23 = vld [vmem:[%s2 + $0x8] sm:$0x1]
    %v24 = vld [vmem:[%s2 + $0x9] sm:$0x1]
    %v25 = vld [vmem:[%s0] sm:$0xff]
    %v26 = vld [vmem:[%s1] sm:$0xff]
    %v27 = vld [vmem:[%s1 + $0x8] sm:$0xff]
    %v28 = vld [vmem:[%s1 + $0x10] sm:$0xff]
    %v29 = vld [vmem:[%s1 + $0x18] sm:$0xff]
    %v30 = vld [vmem:[%s1 + $0x20] sm:$0xff]
    %v31 = vld [vmem:[%s1 + $0x28] sm:$0xff]
    %v32 = vld [vmem:[%s1 + $0x30] sm:$0xff]
    %v33 = vld [vmem:[%s1 + $0x38] sm:$0xff]
    %v34 = vld [vmem:[%s1 + $0x40] sm:$0xff]
    %v35 = vld [vmem:[%s1 + $0x48] sm:$0xff]
    %v36 = vld [vmem:[%s1 + $0x50] sm:$0xff]
    %v37 = vld [vmem:[%s1 + $0x58] sm:$0xff]
    %vm38 = vcmask 523264
    %v40 = vsel %vm38, %v25, 0
    %42 = vmatprep.subr.mxu0 0.0
    %43 = vmatpush1.msra.mxu0 %v26
    %44 = vmatprep.subr.mxu0 0.0
    %45 = vmatpush1.msra.mxu0 %v27
    %46 = vmatprep.subr.mxu0 0.0
    %47 = vmatpush1.msra.mxu0 %v28
    %48 = vmatprep.subr.mxu0 0.0
    %49 = vmatpush1.msra.mxu0 %v29
    %50 = vmatprep.subr.mxu0 0.0
    %51 = vmatpush1.msra.mxu0 %v30
    %52 = vmatprep.subr.mxu0 0.0
    %53 = vmatpush1.msra.mxu0 %v31
    %54 = vmatprep.subr.mxu0 0.0
    %55 = vmatpush1.msra.mxu0 %v32
    %56 = vmatprep.subr.mxu0 0.0
    %57 = vmatpush1.msra.mxu0 %v33
    %58 = vmatprep.subr.mxu0 0.0
    %59 = vmatpush1.msra.mxu0 0.0
    %60 = vmatprep.subr.mxu0 0.0
    %61 = vmatpush1.msra.mxu0 0.0
    %62 = vmatprep.subr.mxu0 0.0
    %63 = vmatpush1.msra.mxu0 0.0
    %64 = vmatprep.subr.mxu0 0.0
    %65 = vmatpush1.msra.mxu0 0.0
    %66 = vmatprep.subr.mxu0 0.0
    %67 = vmatpush1.msra.mxu0 0.0
    %68 = vmatprep.subr.mxu0 0.0
    %69 = vmatpush1.msra.mxu0 0.0
    %70 = vmatprep.subr.mxu0 0.0
    %71 = vmatpush1.msra.mxu0 0.0
    %72 = vmatprep.subr.mxu0 0.0
    %73 = vmatpush1.msra.mxu0 0.0
    %74 = vmatprep.subr.mxu0 0.0
    %75 = vmatpush1.msra.mxu0 0.0
    %76 = vmatprep.subr.mxu0 0.0
    %77 = vmatpush1.msra.mxu0 0.0
    %78 = vmatprep.subr.mxu0 0.0
    %79 = vmatpush1.msra.mxu0 0.0
    %80 = vmatprep.subr.mxu0 0.0
    %81 = vmatpush1.msra.mxu0 0.0
    %82 = vmatprep.subr.mxu0 0.0
    %83 = vmatpush1.msra.mxu0 0.0
    %84 = vmatprep.subr.mxu0 0.0
    %85 = vmatpush1.msra.mxu0 0.0
    %86 = vmatprep.subr.mxu0 0.0
    %87 = vmatpush1.msra.mxu0 0.0
    %88 = vmatprep.subr.mxu0 0.0
    %89 = vmatpush1.msra.mxu0 0.0
    %90 = vmatprep.subr.mxu0 0.0
    %91 = vmatpush1.msra.mxu0 0.0
    %92 = vmatprep.subr.mxu0 0.0
    %93 = vmatpush1.msra.mxu0 0.0
    %94 = vmatprep.subr.mxu0 0.0
    %95 = vmatpush1.msra.mxu0 0.0
    %96 = vmatprep.subr.mxu0 0.0
    %97 = vmatpush1.msra.mxu0 0.0
    %98 = vmatprep.subr.mxu0 0.0
    %99 = vmatpush1.msra.mxu0 0.0
    %100 = vmatprep.subr.mxu0 0.0
    %101 = vmatpush1.msra.mxu0 0.0
    %102 = vmatprep.subr.mxu0 0.0
    %103 = vmatpush1.msra.mxu0 0.0
    %104 = vmatprep.subr.mxu0 0.0
    %105 = vmatpush1.msra.mxu0 0.0
    %106 = vmatprep.mubr.f32.mxu0 0.0
    %107 = vmatmul.mubr.f32.gmra.mrb[0].mxu0 %v40
    %v108 = vpop.f32.mrb[0].mxu0
    %v109 = vadd.f32 0.0, %v108
    %v110 = vpop.f32.mrb[0].mxu0
    %111 = vdwg.mxu0
    %v112 = vlaneseq
    %v113 = vshrl.u32 %v112, 7
    %v114 = vsub.s32 0, %v113
    %v115 = vrot.slane %v15, %v114
    %v116 = vadd.f32 %v109, %v115
    %vm117 = vcmask 261120
    %v118 = vsel %vm117, %v116, 0.0
    %119 = vadd.xlane.f32.xlu0 %v118
    %v120 = vpop.xlane.xlu0 %119
    %v121 = vrcp.pop 32.0
    %v122 = vmul.f32 %v120, %v121
    %v123 = vsub.f32 %v116, %v122
    %v124 = vmul.f32 %v123, %v123
    %v125 = vsel %vm117, %v124, 0.0
    %126 = vadd.xlane.f32.xlu0 %v125
    %v127 = vpop.xlane.xlu0 %126
    %v128 = vmul.f32 %v127, %v121
    %v129 = vadd.f32 %v128, 1e-05
    %v130 = vrsqrt.pop %v129
    %v131 = vmul.f32 %v123, %v130
    %v132 = vlaneseq
    %v133 = vshrl.u32 %v132, 7
    %v134 = vsub.s32 0, %v133
    %v135 = vrot.slane %v16, %v134
    %v136 = vmul.f32 %v131, %v135
    %v137 = vlaneseq
    %v138 = vshrl.u32 %v137, 7
    %v139 = vsub.s32 0, %v138
    %v140 = vrot.slane %v17, %v139
    %v141 = vadd.f32 %v136, %v140
    %v142 = vmax.f32 %v141, 0.0
    %v143 = vlaneseq
    %v144 = vshrl.u32 %v143, 7
    %v145 = vsub.s32 0, %v144
    %v146 = vrot.slane %v21, %v145
    %148 = vrot.lane.b32.xlu0 %v146, 32
    %v149 = vpop.permute.xlu0 %148
    %v151 = vadd.f32 %v109, %v149
    %v152 = vmax.f32 %v151, 0.0
    %v153 = vlaneseq
    %v154 = vshrl.u32 %v153, 7
    %v155 = vsub.s32 0, %v154
    %v156 = vrot.slane %v18, %v155
    %v158 = vsel %vm117, %v142, 0
    %160 = vmatprep.subr.mxu0 0.0
    %161 = vmatpush1.msra.mxu0 %v34
    %162 = vmatprep.subr.mxu0 0.0
    %163 = vmatpush1.msra.mxu0 %v35
    %164 = vmatprep.subr.mxu0 0.0
    %165 = vmatpush1.msra.mxu0 %v36
    %166 = vmatprep.subr.mxu0 0.0
    %167 = vmatpush1.msra.mxu0 %v37
    %168 = vmatprep.subr.mxu0 0.0
    %169 = vmatpush1.msra.mxu0 0.0
    %170 = vmatprep.subr.mxu0 0.0
    %171 = vmatpush1.msra.mxu0 0.0
    %172 = vmatprep.subr.mxu0 0.0
    %173 = vmatpush1.msra.mxu0 0.0
    %174 = vmatprep.subr.mxu0 0.0
    %175 = vmatpush1.msra.mxu0 0.0
    %176 = vmatprep.subr.mxu0 0.0
    %177 = vmatpush1.msra.mxu0 0.0
    %178 = vmatprep.subr.mxu0 0.0
    %179 = vmatpush1.msra.mxu0 0.0
    %180 = vmatprep.subr.mxu0 0.0
    %181 = vmatpush1.msra.mxu0 0.0
    %182 = vmatprep.subr.mxu0 0.0
    %183 = vmatpush1.msra.mxu0 0.0
    %184 = vmatprep.subr.mxu0 0.0
    %185 = vmatpush1.msra.mxu0 0.0
    %186 = vmatprep.subr.mxu0 0.0
    %187 = vmatpush1.msra.mxu0 0.0
    %188 = vmatprep.subr.mxu0 0.0
    %189 = vmatpush1.msra.mxu0 0.0
    %190 = vmatprep.subr.mxu0 0.0
    %191 = vmatpush1.msra.mxu0 0.0
    %192 = vmatprep.subr.mxu0 0.0
    %193 = vmatpush1.msra.mxu0 0.0
    %194 = vmatprep.subr.mxu0 0.0
    %195 = vmatpush1.msra.mxu0 0.0
    %196 = vmatprep.subr.mxu0 0.0
    %197 = vmatpush1.msra.mxu0 0.0
    %198 = vmatprep.subr.mxu0 0.0
    %199 = vmatpush1.msra.mxu0 0.0
    %200 = vmatprep.subr.mxu0 0.0
    %201 = vmatpush1.msra.mxu0 0.0
    %202 = vmatprep.subr.mxu0 0.0
    %203 = vmatpush1.msra.mxu0 0.0
    %204 = vmatprep.subr.mxu0 0.0
    %205 = vmatpush1.msra.mxu0 0.0
    %206 = vmatprep.subr.mxu0 0.0
    %207 = vmatpush1.msra.mxu0 0.0
    %208 = vmatprep.subr.mxu0 0.0
    %209 = vmatpush1.msra.mxu0 0.0
    %210 = vmatprep.subr.mxu0 0.0
    %211 = vmatpush1.msra.mxu0 0.0
    %212 = vmatprep.subr.mxu0 0.0
    %213 = vmatpush1.msra.mxu0 0.0
    %214 = vmatprep.subr.mxu0 0.0
    %215 = vmatpush1.msra.mxu0 0.0
    %216 = vmatprep.subr.mxu0 0.0
    %217 = vmatpush1.msra.mxu0 0.0
    %218 = vmatprep.subr.mxu0 0.0
    %219 = vmatpush1.msra.mxu0 0.0
    %220 = vmatprep.subr.mxu0 0.0
    %221 = vmatpush1.msra.mxu0 0.0
    %222 = vmatprep.subr.mxu0 0.0
    %223 = vmatpush1.msra.mxu0 0.0
    %224 = vmatprep.mubr.f32.mxu0 0.0
    %225 = vmatmul.mubr.f32.gmra.mrb[0].mxu0 %v158
    %v226 = vpop.f32.mrb[0].mxu0
    %v227 = vadd.f32 %v156, %v226
    %v228 = vpop.f32.mrb[0].mxu0
    %229 = vdwg.mxu0
    %vm230 = vcmask 130048
    %v231 = vsel %vm230, %v227, 0.0
    %232 = vadd.xlane.f32.xlu0 %v231
    %v233 = vpop.xlane.xlu0 %232
    %v234 = vrcp.pop 16.0
    %v235 = vmul.f32 %v233, %v234
    %v236 = vsub.f32 %v227, %v235
    %v237 = vmul.f32 %v236, %v236
    %v238 = vsel %vm230, %v237, 0.0
    %239 = vadd.xlane.f32.xlu0 %v238
    %v240 = vpop.xlane.xlu0 %239
    %v241 = vmul.f32 %v240, %v234
    %v242 = vadd.f32 %v241, 1e-05
    %v243 = vrsqrt.pop %v242
    %v244 = vmul.f32 %v236, %v243
    %v245 = vlaneseq
    %v246 = vshrl.u32 %v245, 7
    %v247 = vsub.s32 0, %v246
    %v248 = vrot.slane %v19, %v247
    %v249 = vmul.f32 %v244, %v248
    %v250 = vlaneseq
    %v251 = vshrl.u32 %v250, 7
    %v252 = vsub.s32 0, %v251
    %v253 = vrot.slane %v20, %v252
    %v254 = vadd.f32 %v249, %v253
    %v255 = vmax.f32 %v254, 0.0
    %257 = vrot.lane.b32.xlu0 %v152, 96
    %v258 = vpop.permute.xlu0 %257
    %vm259 = vcmask 64512
    %v261 = vsel %vm259, %v23, 0
    %v263 = vsel %vm259, %v258, 0
    %265 = vmatprep.subr.mxu0 0.0
    %266 = vmatpush1.xpose.msra.mxu0 %v263
    %267 = vmatprep.subr.mxu0 0.0
    %268 = vmatpush1.xpose.msra.mxu0 0.0
    %269 = vmatprep.subr.mxu0 0.0
    %270 = vmatpush1.xpose.msra.mxu0 0.0
    %271 = vmatprep.subr.mxu0 0.0
    %272 = vmatpush1.xpose.msra.mxu0 0.0
    %273 = vmatprep.subr.mxu0 0.0
    %274 = vmatpush1.xpose.msra.mxu0 0.0
    %275 = vmatprep.subr.mxu0 0.0
    %276 = vmatpush1.xpose.msra.mxu0 0.0
    %277 = vmatprep.subr.mxu0 0.0
    %278 = vmatpush1.xpose.msra.mxu0 0.0
    %279 = vmatprep.subr.mxu0 0.0
    %280 = vmatpush1.xpose.msra.mxu0 0.0
    %281 = vmatprep.subr.mxu0 0.0
    %282 = vmatpush1.xpose.msra.mxu0 0.0
    %283 = vmatprep.subr.mxu0 0.0
    %284 = vmatpush1.xpose.msra.mxu0 0.0
    %285 = vmatprep.subr.mxu0 0.0
    %286 = vmatpush1.xpose.msra.mxu0 0.0
    %287 = vmatprep.subr.mxu0 0.0
    %288 = vmatpush1.xpose.msra.mxu0 0.0
    %289 = vmatprep.subr.mxu0 0.0
    %290 = vmatpush1.xpose.msra.mxu0 0.0
    %291 = vmatprep.subr.mxu0 0.0
    %292 = vmatpush1.xpose.msra.mxu0 0.0
    %293 = vmatprep.subr.mxu0 0.0
    %294 = vmatpush1.xpose.msra.mxu0 0.0
    %295 = vmatprep.subr.mxu0 0.0
    %296 = vmatpush1.xpose.msra.mxu0 0.0
    %297 = vmatprep.subr.mxu0 0.0
    %298 = vmatpush1.xpose.msra.mxu0 0.0
    %299 = vmatprep.subr.mxu0 0.0
    %300 = vmatpush1.xpose.msra.mxu0 0.0
    %301 = vmatprep.subr.mxu0 0.0
    %302 = vmatpush1.xpose.msra.mxu0 0.0
    %303 = vmatprep.subr.mxu0 0.0
    %304 = vmatpush1.xpose.msra.mxu0 0.0
    %305 = vmatprep.subr.mxu0 0.0
    %306 = vmatpush1.xpose.msra.mxu0 0.0
    %307 = vmatprep.subr.mxu0 0.0
    %308 = vmatpush1.xpose.msra.mxu0 0.0
    %309 = vmatprep.subr.mxu0 0.0
    %310 = vmatpush1.xpose.msra.mxu0 0.0
    %311 = vmatprep.subr.mxu0 0.0
    %312 = vmatpush1.xpose.msra.mxu0 0.0
    %313 = vmatprep.subr.mxu0 0.0
    %314 = vmatpush1.xpose.msra.mxu0 0.0
    %315 = vmatprep.subr.mxu0 0.0
    %316 = vmatpush1.xpose.msra.mxu0 0.0
    %317 = vmatprep.subr.mxu0 0.0
    %318 = vmatpush1.xpose.msra.mxu0 0.0
    %319 = vmatprep.subr.mxu0 0.0
    %320 = vmatpush1.xpose.msra.mxu0 0.0
    %321 = vmatprep.subr.mxu0 0.0
    %322 = vmatpush1.xpose.msra.mxu0 0.0
    %323 = vmatprep.subr.mxu0 0.0
    %324 = vmatpush1.xpose.msra.mxu0 0.0
    %325 = vmatprep.subr.mxu0 0.0
    %326 = vmatpush1.xpose.msra.mxu0 0.0
    %327 = vmatprep.subr.mxu0 0.0
    %328 = vmatpush1.xpose.msra.mxu0 0.0
    %329 = vmatprep.mubr.f32.mxu0 0.0
    %330 = vmatmul.mubr.f32.gmra.mrb[0].mxu0 %v261
    %v331 = vpop.f32.mrb[0].mxu0
    %v332 = vadd.f32 0.0, %v331
    %v333 = vpop.f32.mrb[0].mxu0
    %334 = vdwg.mxu0
    %v336 = vsel %vm230, %v22, 0
    %v339 = vsel %vm230, %v255, 0
    %341 = vmatprep.subr.mxu0 0.0
    %342 = vmatpush1.xpose.msra.mxu0 %v339
    %343 = vmatprep.subr.mxu0 0.0
    %344 = vmatpush1.xpose.msra.mxu0 0.0
    %345 = vmatprep.subr.mxu0 0.0
    %346 = vmatpush1.xpose.msra.mxu0 0.0
    %347 = vmatprep.subr.mxu0 0.0
    %348 = vmatpush1.xpose.msra.mxu0 0.0
    %349 = vmatprep.subr.mxu0 0.0
    %350 = vmatpush1.xpose.msra.mxu0 0.0
    %351 = vmatprep.subr.mxu0 0.0
    %352 = vmatpush1.xpose.msra.mxu0 0.0
    %353 = vmatprep.subr.mxu0 0.0
    %354 = vmatpush1.xpose.msra.mxu0 0.0
    %355 = vmatprep.subr.mxu0 0.0
    %356 = vmatpush1.xpose.msra.mxu0 0.0
    %357 = vmatprep.subr.mxu0 0.0
    %358 = vmatpush1.xpose.msra.mxu0 0.0
    %359 = vmatprep.subr.mxu0 0.0
    %360 = vmatpush1.xpose.msra.mxu0 0.0
    %361 = vmatprep.subr.mxu0 0.0
    %362 = vmatpush1.xpose.msra.mxu0 0.0
    %363 = vmatprep.subr.mxu0 0.0
    %364 = vmatpush1.xpose.msra.mxu0 0.0
    %365 = vmatprep.subr.mxu0 0.0
    %366 = vmatpush1.xpose.msra.mxu0 0.0
    %367 = vmatprep.subr.mxu0 0.0
    %368 = vmatpush1.xpose.msra.mxu0 0.0
    %369 = vmatprep.subr.mxu0 0.0
    %370 = vmatpush1.xpose.msra.mxu0 0.0
    %371 = vmatprep.subr.mxu0 0.0
    %372 = vmatpush1.xpose.msra.mxu0 0.0
    %373 = vmatprep.subr.mxu0 0.0
    %374 = vmatpush1.xpose.msra.mxu0 0.0
    %375 = vmatprep.subr.mxu0 0.0
    %376 = vmatpush1.xpose.msra.mxu0 0.0
    %377 = vmatprep.subr.mxu0 0.0
    %378 = vmatpush1.xpose.msra.mxu0 0.0
    %379 = vmatprep.subr.mxu0 0.0
    %380 = vmatpush1.xpose.msra.mxu0 0.0
    %381 = vmatprep.subr.mxu0 0.0
    %382 = vmatpush1.xpose.msra.mxu0 0.0
    %383 = vmatprep.subr.mxu0 0.0
    %384 = vmatpush1.xpose.msra.mxu0 0.0
    %385 = vmatprep.subr.mxu0 0.0
    %386 = vmatpush1.xpose.msra.mxu0 0.0
    %387 = vmatprep.subr.mxu0 0.0
    %388 = vmatpush1.xpose.msra.mxu0 0.0
    %389 = vmatprep.subr.mxu0 0.0
    %390 = vmatpush1.xpose.msra.mxu0 0.0
    %391 = vmatprep.subr.mxu0 0.0
    %392 = vmatpush1.xpose.msra.mxu0 0.0
    %393 = vmatprep.subr.mxu0 0.0
    %394 = vmatpush1.xpose.msra.mxu0 0.0
    %395 = vmatprep.subr.mxu0 0.0
    %396 = vmatpush1.xpose.msra.mxu0 0.0
    %397 = vmatprep.subr.mxu0 0.0
    %398 = vmatpush1.xpose.msra.mxu0 0.0
    %399 = vmatprep.subr.mxu0 0.0
    %400 = vmatpush1.xpose.msra.mxu0 0.0
    %401 = vmatprep.subr.mxu0 0.0
    %402 = vmatpush1.xpose.msra.mxu0 0.0
    %403 = vmatprep.subr.mxu0 0.0
    %404 = vmatpush1.xpose.msra.mxu0 0.0
    %405 = vmatprep.mubr.f32.mxu0 0.0
    %406 = vmatmul.mubr.f32.gmra.mrb[0].mxu0 %v336
    %v407 = vpop.f32.mrb[0].mxu0
    %v408 = vadd.f32 %v332, %v407
    %v409 = vpop.f32.mrb[0].mxu0
    %410 = vdwg.mxu0
    %412 = vset.pattern.permute.xlu0 0
    %413 = vperm.xlu0 %412, %v24
    %v414 = vpop.permute.xlu0 %413
    %v416 = vadd.f32 %v408, %v414
    %v417 = vxor.u32 %v416, 2147483648
    %v418 = vmul.f32 %v417, 1.442695
    %v419 = vpow.pop %v418
    %v420 = vadd.f32 %v419, 1.0
    %v421 = vrcp.pop %v420
    %v422 = vmul.f32 1.0, %v421
    %vm423 = vcmask 57344
    %424 = vst.msk [vmem:[#allocation2] sm:$0x1] %vm423, %v422
    // Predicated region
    $region14: #{tpu_custom_call.1} parent=1 // pred_check
      _
    $region15: #{tpu_custom_call.1} parent=1 // pred_check_branch
      %426 = sbr.rel (0) target = $region17
    $region16: #{tpu_custom_call.1} parent=1 // pred_region
      %s428 = ssub.s32 16, 16
      %429 = vsyncadd [#allocation3], %s428
      %s431 = sshll.u32 [#allocation2], 4
      %s432 = int_to_ptr.vmem [resolvable:$true] %s431
      %434 = dma.vmem_to_hbm [thread:$0]  %s432, 16, %s3, [#allocation3]
    $region17: #{tpu_custom_call.1} parent=1 // pred_fallthru
      _
    // Predicated region
    $region18: #{tpu_custom_call.1} parent=1 // pred_check
      _
    $region19: #{tpu_custom_call.1} parent=1 // pred_check_branch
      %436 = sbr.rel (0) target = $region21
    $region20: #{tpu_custom_call.1} parent=1 // pred_region
      %437 = dma.done [#allocation3], 16
    $region21: #{tpu_custom_call.1} parent=1 // pred_fallthru
      _
    %438 = vsyncpa [#allocation3], 1

</llo_original>
